<compile_context>
chip_gen: v7x
topology: tpu7x:2x2x1
jax: 0.10.0
libtpu: 0.0.40
codegen_flags: <defaults>
</compile_context>

<pallas_src>
import jax
import jax.numpy as jnp
from jax.experimental import pallas as pl
from jax.experimental.pallas import tpu as pltpu


def _round_up(a, b):
    return ((a + b - 1) // b) * b


def _pick_tile(n_pad, candidates):
    """Largest candidate tile that divides n_pad."""
    for t in candidates:
        if t <= n_pad and n_pad % t == 0:
            return t
    return candidates[-1]


def _choose_layout(n, f_in, f_pad, in_bytes, vmem_budget):
    """Pick (n_pad, tm, tk) so tiles stay large, divide n_pad, and fit VMEM."""
    # 1) Pad N to a lane multiple and look for large power-of-two tiles.
    n_pad = _round_up(n, 128)
    tk = _pick_tile(n_pad, (1024, 512, 256, 128))
    tm = _pick_tile(n_pad, (512, 256, 128, 64, 32, 16))
    # 2) Awkward N (e.g. 128 * prime) would collapse the K tile: pad more
    #    aggressively instead, so both tiles stay >= 512 (fewer grid steps).
    if n_pad > 512 and tk < 512:
        n_pad = _round_up(n, 512)
        tk = _pick_tile(n_pad, (1024, 512))
        tm = 512
    # 3) Feed both TensorCores on v7x: at least two row tiles.
    if n_pad // tm < 2 and tm >= 32:
        tm //= 2

    # 4) Shrink to the VMEM budget (rarely triggers for typical GCN widths).
    def est(tm_, tk_):
        return (2 * tm_ * tk_ * in_bytes          # adj tile, double-buffered
                + 2 * tk_ * f_in * in_bytes       # x K-stripe, double-buffered
                + 2 * f_in * f_pad * in_bytes     # W.T (small, constant index)
                + 2 * tm_ * f_pad * 4)            # f32 output/accumulator tile

    while est(tm, tk) > vmem_budget and tk > 128:
        tk //= 2
    while est(tm, tk) > vmem_budget and tm > 16:
        tm //= 2
    return n_pad, tm, tk, est(tm, tk)


# --------------------------------------------------------------------------
# Fused kernel: out_tile += adj_tile @ (x_ktile @ W.T), f32 accumulation.
# Grid = (row tiles, K tiles); out block index constant across K, so the f32
# output tile stays resident in VMEM across the reduction ("arbitrary" axis).
# --------------------------------------------------------------------------
def _gcn_fused_kernel(adj_ref, x_ref, wt_ref, out_ref):
    @pl.when(pl.program_id(1) == 0)
    def _init():
        out_ref[...] = jnp.zeros_like(out_ref)

    # Tiny feature transform for this K stripe (recomputed per row tile; the
    # cost is negligible next to the adj stream and it keeps h off HBM).
    h_k = jnp.dot(x_ref[...], wt_ref[...],
                  preferred_element_type=jnp.float32).astype(adj_ref.dtype)
    out_ref[...] += jnp.dot(adj_ref[...], h_k,
                            preferred_element_type=jnp.float32)


def dense_graph_convolution(x, adj, weight, *, compute_dtype=jnp.bfloat16):
    """out = adj @ (x @ weight.T), matching DenseGraphConvolution.forward."""
    n, f_in = x.shape
    f_out, f_in_w = weight.shape
    assert adj.shape == (n, n)
    assert f_in_w == f_in
    out_dtype = x.dtype

    # Lane-dense output columns: pad F_out up to a multiple of 128.
    f_pad = max(128, _round_up(f_out, 128))

    # Generation-aware VMEM budget / limit (128 MiB on v5e/v6e, 64 MiB on v7x).
    try:
        vmem_cap = int(pltpu.get_tpu_info().vmem_capacity_bytes)
    except Exception:
        vmem_cap = 64 * 1024 * 1024
    vmem_budget = int(vmem_cap * 0.70)

    in_bytes = jnp.dtype(compute_dtype).itemsize
    n_pad, tm, tk, est = _choose_layout(n, f_in, f_pad, in_bytes, vmem_budget)

    # Wrapper-side layout plumbing (cheap, one-time): cast to the compute
    # dtype, zero-pad N (zero rows/cols do not perturb the real output rows),
    # pre-transpose + lane-pad the weight so the kernel never relayouts.
    adj_p = jnp.pad(adj.astype(compute_dtype),
                    ((0, n_pad - n), (0, n_pad - n)))
    x_p = jnp.pad(x.astype(compute_dtype), ((0, n_pad - n), (0, 0)))
    wt_p = jnp.pad(weight.T.astype(compute_dtype),
                   ((0, 0), (0, f_pad - f_out)))

    grid = (n_pad // tm, n_pad // tk)
    vmem_limit = int(min(int(vmem_cap * 0.9),
                         max(32 * 1024 * 1024, 2 * est + (8 << 20))))

    out_padded = pl.pallas_call(
        _gcn_fused_kernel,
        out_shape=jax.ShapeDtypeStruct((n_pad, f_pad), jnp.float32),
        grid_spec=pltpu.PrefetchScalarGridSpec(
            num_scalar_prefetch=0,
            grid=grid,
            in_specs=[
                pl.BlockSpec((tm, tk), lambda i, k: (i, k)),       # adj tile
                pl.BlockSpec((tk, f_in), lambda i, k: (k, 0)),     # x K stripe
                pl.BlockSpec((f_in, f_pad), lambda i, k: (0, 0)),  # W.T (small)
            ],
            out_specs=pl.BlockSpec((tm, f_pad), lambda i, k: (i, 0)),
        ),
        compiler_params=pltpu.CompilerParams(
            dimension_semantics=("parallel", "arbitrary"),
            vmem_limit_bytes=vmem_limit,
        ),
    )(adj_p, x_p, wt_p)

    # TODO(synk): return the padded lane-dense (n_pad, f_pad) slab directly
    # when the consumer can tolerate padding; the slice is a small extra copy.
    return out_padded[:n, :f_out].astype(out_dtype)


if __name__ == "__main__":
    # Small shapes consistent with the module: N nodes, in/out channels.
    N, F_IN, F_OUT = 128, 64, 32

    key = jax.random.PRNGKey(0)
    kx, ka, kw = jax.random.split(key, 3)

    x = jax.random.normal(kx, (N, F_IN), dtype=jnp.float32)
    # Symmetric-ish dense adjacency (values in [0, 1)), as used by FGSM attacks.
    adj = jax.random.uniform(ka, (N, N), dtype=jnp.float32)
    adj = 0.5 * (adj + adj.T)
    # Deterministic init of nn.Linear(in_channels, out_channels, bias=False).
    weight = jax.random.normal(kw, (F_OUT, F_IN), dtype=jnp.float32) * (1.0 / jnp.sqrt(F_IN))

    out = dense_graph_convolution(x, adj, weight)
    out = jax.block_until_ready(out)

    # Reference check (plain JAX, f32).  bf16 inputs + f32 accumulation in the
    # kernel -> widen tolerances vs. the pure-f32 reference.
    ref = adj @ (x @ weight.T)
    assert out.shape == (N, F_OUT)
    assert jnp.allclose(out, ref, atol=2e-1, rtol=2e-2), (
        f"max abs err {jnp.max(jnp.abs(out - ref))}")

    print("KERNEL_OK")
</pallas_src>

<mosaic_0001>
module attributes {stable_mosaic.version = 11 : i64} {
  func.func @_gcn_fused_kernel(%arg0: i32, %arg1: i32, %arg2: memref<64x128xbf16, #tpu.memory_space<vmem>>, %arg3: memref<128x64xbf16, #tpu.memory_space<vmem>>, %arg4: memref<64x128xbf16, #tpu.memory_space<vmem>>, %arg5: memref<64x128xf32, #tpu.memory_space<vmem>>) attributes {dimension_semantics = [#tpu.dimension_semantics<parallel>, #tpu.dimension_semantics<arbitrary>], iteration_bounds = array<i64: 2, 1>, scalar_prefetch = 0 : i64, scratch_operands = 0 : i64, tpu.core_type = #tpu.core_type<tc>, window_params = [{transform_indices = @transform_0, window_bounds = array<i64: 64, 128>}, {transform_indices = @transform_1, window_bounds = array<i64: 128, 64>}, {pipeline_mode = #tpu.pipeline_mode<synchronous>, transform_indices = @transform_2, window_bounds = array<i64: 64, 128>}, {transform_indices = @transform_3, window_bounds = array<i64: 64, 128>}]} {
    %c0_i32 = arith.constant 0 : i32
    %0 = arith.cmpi eq, %arg1, %c0_i32 : i32
    %1 = arith.extui %0 : i1 to i32
    %c0_i32_0 = arith.constant 0 : i32
    %2 = arith.cmpi ne, %1, %c0_i32_0 : i32
    scf.if %2 {
      %cst_11 = arith.constant 0.000000e+00 : f32
      %12 = vector.broadcast %cst_11 : f32 to vector<64x128xf32>
      %c0_12 = arith.constant 0 : index
      %c0_13 = arith.constant 0 : index
      %13 = vector.load %arg5[%c0_12, %c0_13] : memref<64x128xf32, #tpu.memory_space<vmem>>, vector<64x128xf32>
      tpu.vector_store %arg5[%c0_12, %c0_13], %12 {strides = array<i32>} : memref<64x128xf32, #tpu.memory_space<vmem>>, vector<64x128xf32>,
    } else {
    }
    %c0 = arith.constant 0 : index
    %c0_1 = arith.constant 0 : index
    %3 = vector.load %arg3[%c0, %c0_1] : memref<128x64xbf16, #tpu.memory_space<vmem>>, vector<128x64xbf16>
    %c0_2 = arith.constant 0 : index
    %c0_3 = arith.constant 0 : index
    %4 = vector.load %arg4[%c0_2, %c0_3] : memref<64x128xbf16, #tpu.memory_space<vmem>>, vector<64x128xbf16>
    %cst = arith.constant dense<0.000000e+00> : vector<128x128xf32>
    %5 = tpu.matmul %3, %4, %cst {dimension_numbers = #tpu.dot_dimension_numbers<[1], [0], [0], [1], [0, 0, 1, 1], [], []>} : vector<128x64xbf16>, vector<64x128xbf16>, vector<128x128xf32> -> vector<128x128xf32>
    %6 = arith.truncf %5 : vector<128x128xf32> to vector<128x128xbf16>
    %c0_4 = arith.constant 0 : index
    %c0_5 = arith.constant 0 : index
    %7 = vector.load %arg5[%c0_4, %c0_5] : memref<64x128xf32, #tpu.memory_space<vmem>>, vector<64x128xf32>
    %c0_6 = arith.constant 0 : index
    %c0_7 = arith.constant 0 : index
    %8 = vector.load %arg2[%c0_6, %c0_7] : memref<64x128xbf16, #tpu.memory_space<vmem>>, vector<64x128xbf16>
    %cst_8 = arith.constant dense<0.000000e+00> : vector<64x128xf32>
    %9 = tpu.matmul %8, %6, %cst_8 {dimension_numbers = #tpu.dot_dimension_numbers<[1], [0], [0], [1], [0, 0, 1, 1], [], []>} : vector<64x128xbf16>, vector<128x128xbf16>, vector<64x128xf32> -> vector<64x128xf32>
    %10 = arith.addf %7, %9 : vector<64x128xf32>
    %c0_9 = arith.constant 0 : index
    %c0_10 = arith.constant 0 : index
    %11 = vector.load %arg5[%c0_9, %c0_10] : memref<64x128xf32, #tpu.memory_space<vmem>>, vector<64x128xf32>
    tpu.vector_store %arg5[%c0_9, %c0_10], %10 {strides = array<i32>} : memref<64x128xf32, #tpu.memory_space<vmem>>, vector<64x128xf32>,
    return
  }
  func.func @transform_0(%arg0: i32, %arg1: i32) -> (i32, i32) {
    %c0_i32 = arith.constant 0 : i32
    return %arg0, %arg1 : i32, i32
  }
  func.func @transform_1(%arg0: i32, %arg1: i32) -> (i32, i32) {
    %c0_i32 = arith.constant 0 : i32
    %c0_i32_0 = arith.constant 0 : i32
    return %arg1, %c0_i32 : i32, i32
  }
  func.func @transform_2(%arg0: i32, %arg1: i32) -> (i32, i32) {
    %c0_i32 = arith.constant 0 : i32
    %c0_i32_0 = arith.constant 0 : i32
    %c0_i32_1 = arith.constant 0 : i32
    return %c0_i32, %c0_i32_0 : i32, i32
  }
  func.func @transform_3(%arg0: i32, %arg1: i32) -> (i32, i32) {
    %c0_i32 = arith.constant 0 : i32
    %c0_i32_0 = arith.constant 0 : i32
    return %arg0, %c0_i32 : i32, i32
  }
}

</mosaic_0001>

<llo_original>
// kernel: tpu_custom_call.1
$region0: #{tpu_custom_call.1}
  #allocation0 [shape = 'u32[]', space=smem, size = 0x4, offset = 0x4, fixed_abs, tag = 'smem constant byte address 0x4 - core index']
  #allocation1 [shape = 'u32[144,128]{1,0:T(1,128)}', space=vmem, size = 0x12000, scoped, tag = 'internal scratch']
  %s0 = inlined_call_operand.vmem [shape: bf16[128,128], index: 0, kind: input, shape index: {}]
  %s1 = inlined_call_operand.vmem [shape: bf16[128,64], index: 1, kind: input, shape index: {}]
  %s2 = inlined_call_operand.vmem [shape: bf16[64,128], index: 2, kind: input, shape index: {}]
  %s3 = inlined_call_operand.hbm [shape: f32[128,128], index: 3, kind: output, shape index: {}]
  %s4 = sld [smem:[#allocation0]]
  $region49: #{tpu_custom_call.1} parent=0
    _
  %s6 = ssub.s32 1, %s4
  %s7 = scalar_select 0, %s6, %s4
  $region1: #{tpu_custom_call.1} parent=0
    #allocation2 [shape = 'u8[65536]{0}', space=vmem, size = 0x10000, scoped, tag = 'output window, operand 0']
    #allocation3 [shape = 's32[2]{0}', space=sflag, size = 0x8, scoped, tag = 'scoped memory for tpu_custom_call.1']
    %8 = vsyncpa [#allocation3], 0
    %s9 = scalar_lea.sflag [#allocation3], 1
    %10 = vsyncpa %s9, 0
    loop: start=0, step=1, limit=4
    $region2: #{tpu_custom_call.1} parent=1 // loop_pre_header
      _
    $region3: #{tpu_custom_call.1} parent=1 // loop_header
      %s12 = sphi 0, %s16
      %p13 = scmp.ge.s32.totalorder %s12, 4
      %s19 = sphi 0, %s31
      %s20 = sphi 0, %s27
      %s21 = sphi 0, %s19
      %s22 = sphi 0, %s20
      %s23 = sphi 0, %s21
      %s24 = sphi 0, %s22
      %s36 = sphi 0, %s38
      %s39 = sphi 0, %s36
      %s40 = sphi 0, %s39
      %s56 = sphi 0, %s40
      %s62 = sphi 0, %s64
      %s65 = sphi 0, %s62
      %s66 = sphi 0, %s65
      %s82 = sphi 0, %s66
      %s86 = sphi 0, %s86
      %s88 = sphi 0, %s86
      %s89 = sphi 0, %s88
      %s103 = sphi 0, %s89
      %s109 = sphi 0, %s111
      %s112 = sphi 0, %s109
      %s113 = sphi 0, %s112
      %s129 = sphi 0, %s113
    $region4: #{tpu_custom_call.1} parent=1 // loop_header_branch
      %15 = sbr.rel (%p13) target = $region8
    $region5: #{tpu_custom_call.1} parent=1 // loop_body
      %s17 = ssub.s32 %s12, 1
      %s18 = ssub.s32 %s12, 2
      %s25 = sadd.s32 1, %s20
      %p26 = scmp.ge.s32.totalorder %s25, 1
      %s27 = scalar_select %p26, 0, %s25
      %s28 = sadd.s32 1, %s19
      %s29 = scalar_select %p26, %s28, %s19
      %p30 = scmp.ge.s32.totalorder %s29, 2
      %s31 = scalar_select %p30, 0, %s29
      %s32 = ssub.s32 %s19, %s31
      %s33 = ssub.s32 %s20, %s27
      %s34 = sor.u32 %s32, %s33
      %p35 = scmp.eq.s32.totalorder %s34, 0
      %s37 = sadd.s32 %s36, 1
      %s38 = scalar_select %p35, %s36, %s37
      %p41 = pneg %p35
      %p42 = scmp.eq.s32.totalorder %s12, 1
      %p43 = por %p41, %p42
      %p44 = scmp.ne.s32.totalorder %s36, %s39
      %p45 = scmp.eq.s32.totalorder %s12, 0
      %p46 = por %p44, %p45
      %p47 = scmp.ne.s32.totalorder %s36, %s39
      %p48 = scmp.eq.s32.totalorder %s17, 1
      %p49 = por %p47, %p48
      %p50 = scmp.ne.s32.totalorder %s39, %s40
      %p51 = scmp.eq.s32.totalorder %s17, 0
      %p52 = por %p50, %p51
      %p53 = scmp.ne.s32.totalorder %s39, %s40
      %p54 = scmp.eq.s32.totalorder %s18, 1
      %p55 = por %p53, %p54
      %p57 = scmp.ne.s32.totalorder %s40, %s56
      %p58 = scmp.eq.s32.totalorder %s18, 0
      %p59 = por %p57, %p58
      %s60 = ssub.s32 %s20, %s27
      %p61 = scmp.eq.s32.totalorder %s60, 0
      %s63 = sadd.s32 %s62, 1
      %s64 = scalar_select %p61, %s62, %s63
      %p67 = pneg %p61
      %p68 = scmp.eq.s32.totalorder %s12, 1
      %p69 = por %p67, %p68
      %p70 = scmp.ne.s32.totalorder %s62, %s65
      %p71 = scmp.eq.s32.totalorder %s12, 0
      %p72 = por %p70, %p71
      %p73 = scmp.ne.s32.totalorder %s62, %s65
      %p74 = scmp.eq.s32.totalorder %s17, 1
      %p75 = por %p73, %p74
      %p76 = scmp.ne.s32.totalorder %s65, %s66
      %p77 = scmp.eq.s32.totalorder %s17, 0
      %p78 = por %p76, %p77
      %p79 = scmp.ne.s32.totalorder %s65, %s66
      %p80 = scmp.eq.s32.totalorder %s18, 1
      %p81 = por %p79, %p80
      %p83 = scmp.ne.s32.totalorder %s66, %s82
      %p84 = scmp.eq.s32.totalorder %s18, 0
      %p85 = por %p83, %p84
      %s87 = sadd.s32 %s86, 1
      %p90 = scmp.eq.s32.totalorder %s12, 1
      %p91 = scmp.ne.s32.totalorder %s86, %s88
      %p92 = scmp.eq.s32.totalorder %s12, 0
      %p93 = por %p91, %p92
      %p94 = scmp.ne.s32.totalorder %s86, %s88
      %p95 = scmp.eq.s32.totalorder %s17, 1
      %p96 = por %p94, %p95
      %p97 = scmp.ne.s32.totalorder %s88, %s89
      %p98 = scmp.eq.s32.totalorder %s17, 0
      %p99 = por %p97, %p98
      %p100 = scmp.ne.s32.totalorder %s88, %s89
      %p101 = scmp.eq.s32.totalorder %s18, 1
      %p102 = por %p100, %p101
      %p104 = scmp.ne.s32.totalorder %s89, %s103
      %p105 = scmp.eq.s32.totalorder %s18, 0
      %p106 = por %p104, %p105
      %s107 = ssub.s32 %s19, %s31
      %p108 = scmp.eq.s32.totalorder %s107, 0
      %s110 = sadd.s32 %s109, 1
      %s111 = scalar_select %p108, %s109, %s110
      %p114 = pneg %p108
      %p115 = scmp.eq.s32.totalorder %s12, 1
      %p116 = por %p114, %p115
      %p117 = scmp.ne.s32.totalorder %s109, %s112
      %p118 = scmp.eq.s32.totalorder %s12, 0
      %p119 = por %p117, %p118
      %p120 = scmp.ne.s32.totalorder %s109, %s112
      %p121 = scmp.eq.s32.totalorder %s17, 1
      %p122 = por %p120, %p121
      %p123 = scmp.ne.s32.totalorder %s112, %s113
      %p124 = scmp.eq.s32.totalorder %s17, 0
      %p125 = por %p123, %p124
      %p126 = scmp.ne.s32.totalorder %s112, %s113
      %p127 = scmp.eq.s32.totalorder %s18, 1
      %p128 = por %p126, %p127
      %p130 = scmp.ne.s32.totalorder %s113, %s129
      %p131 = scmp.eq.s32.totalorder %s18, 0
      %p132 = por %p130, %p131
      %p133 = scmp.le.s32.totalorder 1, %s12
      %p134 = scmp.lt.s32.totalorder %s12, 3
      %p135 = pnand %p133, %p134
      %p136 = pneg %p135
      // Predicated region
      $region9: #{tpu_custom_call.1} parent=5 // pred_check
        _
      $region10: #{tpu_custom_call.1} parent=5 // pred_check_branch
        %138 = sbr.rel (%p135) target = $region12
      $region11: #{tpu_custom_call.1} parent=5 // pred_region
        %s139 = ssub.s32 %s12, 1
        // Predicated region
        $region13: #{tpu_custom_call.1} parent=11 // pred_check
          %p140 = pneg %p78
        $region14: #{tpu_custom_call.1} parent=11 // pred_check_branch
          %142 = sbr.rel (%p140) target = $region16
        $region15: #{tpu_custom_call.1} parent=11 // pred_region
          %s143 = smul.u32 16, %s22
          %p144 = scmp.lt.s32.totalorder %s143, 15
          %s145 = scalar_select %p144, %s143, 15
          %s146 = smul.addr %s145, 4
          %s147 = scalar_lea.vmem %s1, %s146
          %s148 = smul.u32 16, %s22
        $region16: #{tpu_custom_call.1} parent=11 // pred_fallthru
          _
        // Predicated region
        $region17: #{tpu_custom_call.1} parent=11 // pred_check
          %p149 = pneg %p99
        $region18: #{tpu_custom_call.1} parent=11 // pred_check_branch
          %151 = sbr.rel (%p149) target = $region20
        $region19: #{tpu_custom_call.1} parent=11 // pred_region
          _
        $region20: #{tpu_custom_call.1} parent=11 // pred_fallthru
          _
      $region12: #{tpu_custom_call.1} parent=5 // pred_fallthru
        _
      %p152 = scmp.lt.s32.totalorder %s12, 2
      // Predicated region
      $region21: #{tpu_custom_call.1} parent=5 // pred_check
        %p153 = pneg %p152
      $region22: #{tpu_custom_call.1} parent=5 // pred_check_branch
        %155 = sbr.rel (%p153) target = $region24
      $region23: #{tpu_custom_call.1} parent=5 // pred_region
        // Predicated region
        $region25: #{tpu_custom_call.1} parent=23 // pred_check
          %p156 = pneg %p46
        $region26: #{tpu_custom_call.1} parent=23 // pred_check_branch
          %158 = sbr.rel (%p156) target = $region28
        $region27: #{tpu_custom_call.1} parent=23 // pred_region
          %s159 = smul.u32 8, %s19
          %p160 = scmp.lt.s32.totalorder %s159, 15
          %s161 = scalar_select %p160, %s159, 15
          %p162 = scmp.lt.s32.totalorder %s20, 0
          %s163 = scalar_select %p162, %s20, 0
          %s164 = sadd.s32 %s163, %s161
          %s165 = smul.addr %s164, 4
          %s166 = scalar_lea.vmem %s0, %s165
          %s167 = smul.u32 8, %s19
        $region28: #{tpu_custom_call.1} parent=23 // pred_fallthru
          _
      $region24: #{tpu_custom_call.1} parent=5 // pred_fallthru
        _
      %p168 = scmp.le.s32.totalorder 1, %s12
      %p169 = scmp.lt.s32.totalorder %s12, 3
      %p170 = pnand %p168, %p169
      %p171 = pneg %p170
      // Predicated region
      $region29: #{tpu_custom_call.1} parent=5 // pred_check
        _
      $region30: #{tpu_custom_call.1} parent=5 // pred_check_branch
        %173 = sbr.rel (%p170) target = $region32
      $region31: #{tpu_custom_call.1} parent=5 // pred_region
        %s174 = ssub.s32 %s12, 1
        %s175 = smul.u32 8, %s21
        %p176 = scmp.lt.s32.totalorder %s175, 15
        %s177 = scalar_select %p176, %s175, 15
        %p178 = scmp.lt.s32.totalorder %s22, 0
        %s179 = scalar_select %p178, %s22, 0
        %s180 = sadd.s32 %s179, %s177
        %s181 = smul.addr %s180, 4
        %s182 = scalar_lea.vmem %s0, %s181
        %p183 = pneg %p52
        %p184 = pneg %p49
        %s185 = smul.u32 16, %s22
        %p186 = scmp.lt.s32.totalorder %s185, 15
        %s187 = scalar_select %p186, %s185, 15
        %s188 = smul.addr %s187, 4
        %s189 = scalar_lea.vmem %s1, %s188
        %p190 = pneg %p78
        %p191 = pneg %p75
        %p192 = pneg %p99
        %p193 = pneg %p96
        %p194 = pneg %p125
        %p195 = pneg %p122
        %s196 = sand.u32 %s112, 1
        %s197 = scalar_lea.sflag [#allocation3], %s196
        %s198 = sand.u32 %s112, 1
        %s199 = smul.addr %s198, 64
        %s200 = scalar_lea.vmem [#allocation2], %s199
        %s201 = smul.u32 8, %s21
        %p202 = scmp.lt.s32.totalorder %s201, 15
        %s203 = scalar_select %p202, %s201, 15
        %p204 = scmp.lt.s32.totalorder %s22, 0
        %s205 = scalar_select %p204, %s22, 0
        %s206 = sadd.s32 %s205, %s203
        %s207 = smul.addr %s206, 4
        %s208 = scalar_lea.vmem %s0, %s207
        %s209 = smul.u32 8, %s21
        %s210 = smul.u32 16, %s22
        %p211 = scmp.lt.s32.totalorder %s210, 15
        %s212 = scalar_select %p211, %s210, 15
        %s213 = smul.addr %s212, 4
        %s214 = scalar_lea.vmem %s1, %s213
        %s215 = smul.u32 16, %s22
        %s216 = smul.u32 8, %s21
        %p218 = scmp.eq.s32.totalorder %s22, 0
        // Predicated region
        $region33: #{tpu_custom_call.1} parent=31 // pred_check
          %p219 = pneg %p218
        $region34: #{tpu_custom_call.1} parent=31 // pred_check_branch
          %221 = sbr.rel (%p219) target = $region36
        $region35: #{tpu_custom_call.1} parent=31 // pred_region
          %222 = vst [vmem:[%s200] sm:$0xff] 0.0
          %223 = vst [vmem:[%s200 + $0x8] sm:$0xff] 0.0
          %224 = vst [vmem:[%s200 + $0x10] sm:$0xff] 0.0
          %225 = vst [vmem:[%s200 + $0x18] sm:$0xff] 0.0
          %226 = vst [vmem:[%s200 + $0x20] sm:$0xff] 0.0
          %227 = vst [vmem:[%s200 + $0x28] sm:$0xff] 0.0
          %228 = vst [vmem:[%s200 + $0x30] sm:$0xff] 0.0
          %229 = vst [vmem:[%s200 + $0x38] sm:$0xff] 0.0
        $region36: #{tpu_custom_call.1} parent=31 // pred_fallthru
          _
        %v230 = vld [vmem:[%s214] sm:$0xf]
        %v231 = vld [vmem:[%s214 + $0x4] sm:$0xf]
        %v232 = vld [vmem:[%s214 + $0x8] sm:$0xf]
        %v233 = vld [vmem:[%s214 + $0xc] sm:$0xf]
        %v234 = vld [vmem:[%s214 + $0x10] sm:$0xf]
        %v235 = vld [vmem:[%s214 + $0x14] sm:$0xf]
        %v236 = vld [vmem:[%s214 + $0x18] sm:$0xf]
        %v237 = vld [vmem:[%s214 + $0x1c] sm:$0xf]
        %v238 = vld [vmem:[%s214 + $0x20] sm:$0xf]
        %v239 = vld [vmem:[%s214 + $0x24] sm:$0xf]
        %v240 = vld [vmem:[%s214 + $0x28] sm:$0xf]
        %v241 = vld [vmem:[%s214 + $0x2c] sm:$0xf]
        %v242 = vld [vmem:[%s214 + $0x30] sm:$0xf]
        %v243 = vld [vmem:[%s214 + $0x34] sm:$0xf]
        %v244 = vld [vmem:[%s214 + $0x38] sm:$0xf]
        %v245 = vld [vmem:[%s214 + $0x3c] sm:$0xf]
        %v246 = vld [vmem:[%s2] sm:$0xf]
        %v247 = vld [vmem:[%s2 + $0x4] sm:$0xf]
        %v248 = vld [vmem:[%s2 + $0x8] sm:$0xf]
        %v249 = vld [vmem:[%s2 + $0xc] sm:$0xf]
        %v250 = vld [vmem:[%s2 + $0x10] sm:$0xf]
        %v251 = vld [vmem:[%s2 + $0x14] sm:$0xf]
        %v252 = vld [vmem:[%s2 + $0x18] sm:$0xf]
        %v253 = vld [vmem:[%s2 + $0x1c] sm:$0xf]
        %v270 = vunpack.c.l.b16 %v230
        %v271 = vunpack.c.l.b16 %v231
        %v272 = vunpack.c.l.b16 %v232
        %v273 = vunpack.c.l.b16 %v233
        %v274 = vunpack.c.l.b16 %v234
        %v275 = vunpack.c.l.b16 %v235
        %v276 = vunpack.c.l.b16 %v236
        %v277 = vunpack.c.l.b16 %v237
        %v278 = vunpack.c.l.b16 %v238
        %v279 = vunpack.c.l.b16 %v239
        %v280 = vunpack.c.l.b16 %v240
        %v281 = vunpack.c.l.b16 %v241
        %v282 = vunpack.c.l.b16 %v242
        %v283 = vunpack.c.l.b16 %v243
        %v284 = vunpack.c.l.b16 %v244
        %v285 = vunpack.c.l.b16 %v245
        %v286 = vpack.c.b16 %v271, %v270
        %v287 = vpack.c.b16 %v273, %v272
        %v288 = vpack.c.b16 %v275, %v274
        %v289 = vpack.c.b16 %v277, %v276
        %v290 = vpack.c.b16 %v279, %v278
        %v291 = vpack.c.b16 %v281, %v280
        %v292 = vpack.c.b16 %v283, %v282
        %v293 = vpack.c.b16 %v285, %v284
        %v302 = vunpack.c.l.b16 %v246
        %v303 = vunpack.c.l.b16 %v247
        %v304 = vunpack.c.l.b16 %v248
        %v305 = vunpack.c.l.b16 %v249
        %v306 = vunpack.c.l.b16 %v250
        %v307 = vunpack.c.l.b16 %v251
        %v308 = vunpack.c.l.b16 %v252
        %v309 = vunpack.c.l.b16 %v253
        %v310 = vpack.c.b16 %v303, %v302
        %v311 = vpack.c.b16 %v305, %v304
        %v312 = vpack.c.b16 %v307, %v306
        %v313 = vpack.c.b16 %v309, %v308
        %vm318 = vcmask 523264
        %v320 = vsel %vm318, %v286, 0
        %v323 = vsel %vm318, %v287, 0
        %v326 = vsel %vm318, %v288, 0
        %v329 = vsel %vm318, %v289, 0
        %v332 = vsel %vm318, %v290, 0
        %v335 = vsel %vm318, %v291, 0
        %v338 = vsel %vm318, %v292, 0
        %v341 = vsel %vm318, %v293, 0
        %343 = vmatprep.subr.bf16.mxu0 0
        %344 = vmatpush1.bf16.msra.mxu0 %v310
        %345 = vmatprep.subr.bf16.mxu0 0
        %346 = vmatpush1.bf16.msra.mxu0 %v311
        %347 = vmatprep.subr.bf16.mxu0 0
        %348 = vmatpush1.bf16.msra.mxu0 %v312
        %349 = vmatprep.subr.bf16.mxu0 0
        %350 = vmatpush1.bf16.msra.mxu0 %v313
        %351 = vmatprep.subr.bf16.mxu0 0
        %352 = vmatpush1.bf16.msra.mxu0 0
        %353 = vmatprep.subr.bf16.mxu0 0
        %354 = vmatpush1.bf16.msra.mxu0 0
        %355 = vmatprep.subr.bf16.mxu0 0
        %356 = vmatpush1.bf16.msra.mxu0 0
        %357 = vmatprep.subr.bf16.mxu0 0
        %358 = vmatpush1.bf16.msra.mxu0 0
        %359 = vmatprep.subr.bf16.mxu0 0
        %360 = vmatpush1.bf16.msra.mxu0 0
        %361 = vmatprep.subr.bf16.mxu0 0
        %362 = vmatpush1.bf16.msra.mxu0 0
        %363 = vmatprep.subr.bf16.mxu0 0
        %364 = vmatpush1.bf16.msra.mxu0 0
        %365 = vmatprep.subr.bf16.mxu0 0
        %366 = vmatpush1.bf16.msra.mxu0 0
        %367 = vmatprep.subr.bf16.mxu0 0
        %368 = vmatpush1.bf16.msra.mxu0 0
        %369 = vmatprep.subr.bf16.mxu0 0
        %370 = vmatpush1.bf16.msra.mxu0 0
        %371 = vmatprep.subr.bf16.mxu0 0
        %372 = vmatpush1.bf16.msra.mxu0 0
        %373 = vmatprep.subr.bf16.mxu0 0
        %374 = vmatpush1.bf16.msra.mxu0 0
        %375 = vmatprep.mubr.bf16.mxu0 0
        %376 = vmatmul.mubr.bf16.gmra.mrb[0].mxu0 %v320
        %v377 = vpop.f32.mrb[0].mxu0
        %v378 = vadd.f32 0.0, %v377
        %v379 = vpop.f32.mrb[0].mxu0
        %v380 = vpop.f32.mrb[0].mxu0
        %v381 = vadd.f32 0.0, %v380
        %v382 = vpop.f32.mrb[0].mxu0
        %383 = vmatprep.mubr.bf16.mxu0 0
        %384 = vmatmul.mubr.bf16.gmra.mrb[0].mxu0 %v323
        %v385 = vpop.f32.mrb[0].mxu0
        %v386 = vadd.f32 0.0, %v385
        %v387 = vpop.f32.mrb[0].mxu0
        %v388 = vpop.f32.mrb[0].mxu0
        %v389 = vadd.f32 0.0, %v388
        %v390 = vpop.f32.mrb[0].mxu0
        %391 = vmatprep.mubr.bf16.mxu0 0
        %392 = vmatmul.mubr.bf16.gmra.mrb[0].mxu0 %v326
        %v393 = vpop.f32.mrb[0].mxu0
        %v394 = vadd.f32 0.0, %v393
        %v395 = vpop.f32.mrb[0].mxu0
        %v396 = vpop.f32.mrb[0].mxu0
        %v397 = vadd.f32 0.0, %v396
        %v398 = vpop.f32.mrb[0].mxu0
        %399 = vmatprep.mubr.bf16.mxu0 0
        %400 = vmatmul.mubr.bf16.gmra.mrb[0].mxu0 %v329
        %v401 = vpop.f32.mrb[0].mxu0
        %v402 = vadd.f32 0.0, %v401
        %v403 = vpop.f32.mrb[0].mxu0
        %v404 = vpop.f32.mrb[0].mxu0
        %v405 = vadd.f32 0.0, %v404
        %v406 = vpop.f32.mrb[0].mxu0
        %407 = vmatprep.mubr.bf16.mxu0 0
        %408 = vmatmul.mubr.bf16.gmra.mrb[0].mxu0 %v332
        %v409 = vpop.f32.mrb[0].mxu0
        %v410 = vadd.f32 0.0, %v409
        %v411 = vpop.f32.mrb[0].mxu0
        %v412 = vpop.f32.mrb[0].mxu0
        %v413 = vadd.f32 0.0, %v412
        %v414 = vpop.f32.mrb[0].mxu0
        %415 = vmatprep.mubr.bf16.mxu0 0
        %416 = vmatmul.mubr.bf16.gmra.mrb[0].mxu0 %v335
        %v417 = vpop.f32.mrb[0].mxu0
        %v418 = vadd.f32 0.0, %v417
        %v419 = vpop.f32.mrb[0].mxu0
        %v420 = vpop.f32.mrb[0].mxu0
        %v421 = vadd.f32 0.0, %v420
        %v422 = vpop.f32.mrb[0].mxu0
        %423 = vmatprep.mubr.bf16.mxu0 0
        %424 = vmatmul.mubr.bf16.gmra.mrb[0].mxu0 %v338
        %v425 = vpop.f32.mrb[0].mxu0
        %v426 = vadd.f32 0.0, %v425
        %v427 = vpop.f32.mrb[0].mxu0
        %v428 = vpop.f32.mrb[0].mxu0
        %v429 = vadd.f32 0.0, %v428
        %v430 = vpop.f32.mrb[0].mxu0
        %431 = vmatprep.mubr.bf16.mxu0 0
        %432 = vmatmul.mubr.bf16.gmra.mrb[0].mxu0 %v341
        %v433 = vpop.f32.mrb[0].mxu0
        %v434 = vadd.f32 0.0, %v433
        %v435 = vpop.f32.mrb[0].mxu0
        %v436 = vpop.f32.mrb[0].mxu0
        %v437 = vadd.f32 0.0, %v436
        %v438 = vpop.f32.mrb[0].mxu0
        %439 = vdwg.mxu0
        %v440 = vpack.c.bf16 %v381, %v378
        %v441 = vpack.c.bf16 %v389, %v386
        %v442 = vpack.c.bf16 %v397, %v394
        %v443 = vpack.c.bf16 %v405, %v402
        %v444 = vpack.c.bf16 %v413, %v410
        %v445 = vpack.c.bf16 %v421, %v418
        %v446 = vpack.c.bf16 %v429, %v426
        %v447 = vpack.c.bf16 %v437, %v434
        %v448 = vld [vmem:[%s200] sm:$0xff]
        %v449 = vld [vmem:[%s200 + $0x8] sm:$0xff]
        %v450 = vld [vmem:[%s200 + $0x10] sm:$0xff]
        %v451 = vld [vmem:[%s200 + $0x18] sm:$0xff]
        %v452 = vld [vmem:[%s200 + $0x20] sm:$0xff]
        %v453 = vld [vmem:[%s200 + $0x28] sm:$0xff]
        %v454 = vld [vmem:[%s200 + $0x30] sm:$0xff]
        %v455 = vld [vmem:[%s200 + $0x38] sm:$0xff]
        %v456 = vld [vmem:[%s208] sm:$0xf]
        %v457 = vld [vmem:[%s208 + $0x4] sm:$0xf]
        %v458 = vld [vmem:[%s208 + $0x8] sm:$0xf]
        %v459 = vld [vmem:[%s208 + $0xc] sm:$0xf]
        %v460 = vld [vmem:[%s208 + $0x10] sm:$0xf]
        %v461 = vld [vmem:[%s208 + $0x14] sm:$0xf]
        %v462 = vld [vmem:[%s208 + $0x18] sm:$0xf]
        %v463 = vld [vmem:[%s208 + $0x1c] sm:$0xf]
        %v472 = vunpack.c.l.b16 %v456
        %v473 = vunpack.c.l.b16 %v457
        %v474 = vunpack.c.l.b16 %v458
        %v475 = vunpack.c.l.b16 %v459
        %v476 = vunpack.c.l.b16 %v460
        %v477 = vunpack.c.l.b16 %v461
        %v478 = vunpack.c.l.b16 %v462
        %v479 = vunpack.c.l.b16 %v463
        %v480 = vpack.c.b16 %v473, %v472
        %v481 = vpack.c.b16 %v475, %v474
        %v482 = vpack.c.b16 %v477, %v476
        %v483 = vpack.c.b16 %v479, %v478
        %488 = vmatprep.subr.bf16.mxu0 0
        %489 = vmatpush1.bf16.msra.mxu0 %v440
        %490 = vmatprep.subr.bf16.mxu0 0
        %491 = vmatpush1.bf16.msra.mxu0 %v441
        %492 = vmatprep.subr.bf16.mxu0 0
        %493 = vmatpush1.bf16.msra.mxu0 %v442
        %494 = vmatprep.subr.bf16.mxu0 0
        %495 = vmatpush1.bf16.msra.mxu0 %v443
        %496 = vmatprep.subr.bf16.mxu0 0
        %497 = vmatpush1.bf16.msra.mxu0 %v444
        %498 = vmatprep.subr.bf16.mxu0 0
        %499 = vmatpush1.bf16.msra.mxu0 %v445
        %500 = vmatprep.subr.bf16.mxu0 0
        %501 = vmatpush1.bf16.msra.mxu0 %v446
        %502 = vmatprep.subr.bf16.mxu0 0
        %503 = vmatpush1.bf16.msra.mxu0 %v447
        %504 = vmatprep.subr.bf16.mxu0 0
        %505 = vmatpush1.bf16.msra.mxu0 0
        %506 = vmatprep.subr.bf16.mxu0 0
        %507 = vmatpush1.bf16.msra.mxu0 0
        %508 = vmatprep.subr.bf16.mxu0 0
        %509 = vmatpush1.bf16.msra.mxu0 0
        %510 = vmatprep.subr.bf16.mxu0 0
        %511 = vmatpush1.bf16.msra.mxu0 0
        %512 = vmatprep.subr.bf16.mxu0 0
        %513 = vmatpush1.bf16.msra.mxu0 0
        %514 = vmatprep.subr.bf16.mxu0 0
        %515 = vmatpush1.bf16.msra.mxu0 0
        %516 = vmatprep.subr.bf16.mxu0 0
        %517 = vmatpush1.bf16.msra.mxu0 0
        %518 = vmatprep.subr.bf16.mxu0 0
        %519 = vmatpush1.bf16.msra.mxu0 0
        %520 = vmatprep.mubr.bf16.mxu0 0
        %521 = vmatmul.mubr.bf16.gmra.mrb[0].mxu0 %v480
        %v522 = vpop.f32.mrb[0].mxu0
        %v523 = vadd.f32 0.0, %v522
        %v524 = vpop.f32.mrb[0].mxu0
        %v525 = vpop.f32.mrb[0].mxu0
        %v526 = vadd.f32 0.0, %v525
        %v527 = vpop.f32.mrb[0].mxu0
        %528 = vmatprep.mubr.bf16.mxu0 0
        %529 = vmatmul.mubr.bf16.gmra.mrb[0].mxu0 %v481
        %v530 = vpop.f32.mrb[0].mxu0
        %v531 = vadd.f32 0.0, %v530
        %v532 = vpop.f32.mrb[0].mxu0
        %v533 = vpop.f32.mrb[0].mxu0
        %v534 = vadd.f32 0.0, %v533
        %v535 = vpop.f32.mrb[0].mxu0
        %536 = vmatprep.mubr.bf16.mxu0 0
        %537 = vmatmul.mubr.bf16.gmra.mrb[0].mxu0 %v482
        %v538 = vpop.f32.mrb[0].mxu0
        %v539 = vadd.f32 0.0, %v538
        %v540 = vpop.f32.mrb[0].mxu0
        %v541 = vpop.f32.mrb[0].mxu0
        %v542 = vadd.f32 0.0, %v541
        %v543 = vpop.f32.mrb[0].mxu0
        %544 = vmatprep.mubr.bf16.mxu0 0
        %545 = vmatmul.mubr.bf16.gmra.mrb[0].mxu0 %v483
        %v546 = vpop.f32.mrb[0].mxu0
        %v547 = vadd.f32 0.0, %v546
        %v548 = vpop.f32.mrb[0].mxu0
        %v549 = vpop.f32.mrb[0].mxu0
        %v550 = vadd.f32 0.0, %v549
        %v551 = vpop.f32.mrb[0].mxu0
        %552 = vdwg.mxu0
        %v553 = vadd.f32 %v448, %v523
        %v554 = vadd.f32 %v449, %v526
        %v555 = vadd.f32 %v450, %v531
        %v556 = vadd.f32 %v451, %v534
        %v557 = vadd.f32 %v452, %v539
        %v558 = vadd.f32 %v453, %v542
        %v559 = vadd.f32 %v454, %v547
        %v560 = vadd.f32 %v455, %v550
        %561 = vst [vmem:[%s200] sm:$0xff] %v553
        %562 = vst [vmem:[%s200 + $0x8] sm:$0xff] %v554
        %563 = vst [vmem:[%s200 + $0x10] sm:$0xff] %v555
        %564 = vst [vmem:[%s200 + $0x18] sm:$0xff] %v556
        %565 = vst [vmem:[%s200 + $0x20] sm:$0xff] %v557
        %566 = vst [vmem:[%s200 + $0x28] sm:$0xff] %v558
        %567 = vst [vmem:[%s200 + $0x30] sm:$0xff] %v559
        %568 = vst [vmem:[%s200 + $0x38] sm:$0xff] %v560
        %s569 = sand.u32 %s112, 1
        %s570 = scalar_lea.sflag [#allocation3], %s569
        %s571 = sand.u32 %s112, 1
        %s572 = smul.addr %s571, 64
        %s573 = scalar_lea.vmem [#allocation2], %s572
        // Predicated region
        $region37: #{tpu_custom_call.1} parent=31 // pred_check
          %p574 = pneg %p122
        $region38: #{tpu_custom_call.1} parent=31 // pred_check_branch
          %576 = sbr.rel (%p574) target = $region40
        $region39: #{tpu_custom_call.1} parent=31 // pred_region
          %s577 = smul.u32 8, %s21
          %s579 = ssub.s32 1024, 1024
          %580 = vsyncadd %s570, %s579
          %s581 = smul.addr %s577, 128
          %s582 = scalar_lea.hbm %s3, %s581
          %s583 = sshll.u32 %s573, 4
          %s584 = int_to_ptr.vmem [resolvable:$true] %s583
          %589 = dma.vmem_to_hbm [thread:$0]  %s584, 1024, %s582, %s570, 128, 128, 8
        $region40: #{tpu_custom_call.1} parent=31 // pred_fallthru
          _
      $region32: #{tpu_custom_call.1} parent=5 // pred_fallthru
        _
      %p590 = scmp.le.s32.totalorder 2, %s12
      // Predicated region
      $region41: #{tpu_custom_call.1} parent=5 // pred_check
        %p591 = pneg %p590
      $region42: #{tpu_custom_call.1} parent=5 // pred_check_branch
        %593 = sbr.rel (%p591) target = $region44
      $region43: #{tpu_custom_call.1} parent=5 // pred_region
        %s594 = ssub.s32 %s12, 2
        // Predicated region
        $region45: #{tpu_custom_call.1} parent=43 // pred_check
          %p595 = pneg %p128
        $region46: #{tpu_custom_call.1} parent=43 // pred_check_branch
          %597 = sbr.rel (%p595) target = $region48
        $region47: #{tpu_custom_call.1} parent=43 // pred_region
          %s598 = sand.u32 %s113, 1
          %s599 = scalar_lea.sflag [#allocation3], %s598
          %s600 = sand.u32 %s113, 1
          %s601 = smul.addr %s600, 64
          %s602 = scalar_lea.vmem [#allocation2], %s601
          %603 = dma.done %s599, 1024
        $region48: #{tpu_custom_call.1} parent=43 // pred_fallthru
          _
      $region44: #{tpu_custom_call.1} parent=5 // pred_fallthru
        _
    $region6: #{tpu_custom_call.1} parent=1 // loop_footer
      %s16 = sadd.s32 1, %s12
    $region7: #{tpu_custom_call.1} parent=1 // loop_footer_branch
      %11 = sbr.rel target = $region3
    $region8: #{tpu_custom_call.1} parent=1 // loop_exit
      _
    %604 = vsyncpa [#allocation3], 1
    %s605 = scalar_lea.sflag [#allocation3], 1
    %606 = vsyncpa %s605, 1

</llo_original>
